<compile_context>
chip_gen: v5e
topology: v5e:2x2
jax: 0.10.0
libtpu: 0.0.40
codegen_flags: <defaults>
</compile_context>

<pallas_src>
import functools

import jax
import jax.numpy as jnp
from jax.experimental import pallas as pl
from jax.experimental.pallas import tpu as pltpu


def _round_up(x, m):
    return ((x + m - 1) // m) * m


def _sublane_multiple(dtype):
    """Minimum second-to-last block granularity for a dtype (8/16/32 sublanes)."""
    return {4: 8, 2: 16, 1: 32}.get(jnp.dtype(dtype).itemsize, 8)


def transition_mlp_kernel(x_ref, w_ref, b_ref, o_ref):
    """One row tile: o = x @ W12 + b12, f32 accumulation on the MXU."""
    o = jnp.dot(x_ref[...], w_ref[...],
                preferred_element_type=jnp.float32) + b_ref[...]
    o_ref[...] = o.astype(o_ref.dtype)


def prepare_transition_mlp_params(w_dense, b_dense, w_decoder, b_decoder,
                                  *, compute_dtype=None):
    """One-time prep: fold dense+decoder into a single affine map.

    PyTorch Linear layout: weight [out, in], bias [out].
      out = (x @ Wd.T + bd) @ We.T + be
          =  x @ (Wd.T @ We.T) + (bd @ We.T + be)
    Fold is computed in f32 at HIGHEST precision (one-time cost).
    Only valid while dropout is identity (eval mode).
    """
    if compute_dtype is None:
        compute_dtype = w_dense.dtype
    wd = w_dense.astype(jnp.float32)      # [H, D_in]
    bd = b_dense.astype(jnp.float32)      # [H]
    we = w_decoder.astype(jnp.float32)    # [D_out, H]
    be = b_decoder.astype(jnp.float32)    # [D_out]

    w12 = jnp.matmul(wd.T, we.T, precision=jax.lax.Precision.HIGHEST)   # [D_in, D_out]
    b12 = jnp.matmul(bd[None, :], we.T,
                     precision=jax.lax.Precision.HIGHEST) + be[None, :]  # [1, D_out]

    return {
        "w12": w12.astype(compute_dtype),          # fed to the MXU in compute dtype
        "b12": b12.astype(jnp.float32),            # added to the f32 accumulator
        "d_out": int(w12.shape[1]),
    }


@functools.partial(jax.jit, static_argnames=("tile_n",))
def _forward_impl(x2d, w12, b12, *, tile_n):
    n, d_in = x2d.shape
    d_out = w12.shape[1]
    itemsize = jnp.dtype(x2d.dtype).itemsize

    cost = pl.CostEstimate(
        flops=2 * n * d_in * d_out,
        transcendentals=0,
        bytes_accessed=(n * d_in * itemsize            # x read
                        + d_in * d_out * itemsize      # W12 read (once)
                        + d_out * 4                    # b12 read (once)
                        + n * d_out * itemsize),       # out write (unpadded)
    )

    return pl.pallas_call(
        transition_mlp_kernel,
        out_shape=jax.ShapeDtypeStruct((n, d_out), x2d.dtype),
        grid_spec=pltpu.PrefetchScalarGridSpec(
            num_scalar_prefetch=0,
            grid=(pl.cdiv(n, tile_n),),
            in_specs=[
                pl.BlockSpec((tile_n, d_in), lambda i: (i, 0)),   # x (pipelined)
                pl.BlockSpec((d_in, d_out), lambda i: (0, 0)),    # W12 (resident; tiny)
                pl.BlockSpec((1, d_out), lambda i: (0, 0)),       # b12 (resident; tiny)
            ],
            out_specs=pl.BlockSpec((tile_n, d_out), lambda i: (i, 0)),
        ),
        compiler_params=pltpu.CompilerParams(
            # Megacore sharding of the row grid on v7x; harmless on v5e/v6e.
            dimension_semantics=("parallel",),
        ),
        cost_estimate=cost,
    )(x2d, w12, b12)


def transition_mlp_forward(features, params, *, tile_n=2048, use_pallas=None):
    """features: [..., input_size]; params from prepare_transition_mlp_params."""
    orig_shape = features.shape
    d_in = orig_shape[-1]
    x2d = features.reshape(-1, d_in)                  # [N, D_in]
    n = x2d.shape[0]
    w12, b12 = params["w12"], params["b12"]
    d_out = params["d_out"]
    itemsize = jnp.dtype(x2d.dtype).itemsize

    if use_pallas is None:
        # Tiny problems: pallas_call launch + pipeline prologue dominates;
        # XLA's fused dot is strictly faster below a few hundred KB.
        use_pallas = n * d_in * itemsize >= (256 << 10)

    if not use_pallas:
        out2d = (jnp.matmul(x2d, w12.astype(x2d.dtype),
                            preferred_element_type=jnp.float32)
                 + b12).astype(x2d.dtype)
        return out2d.reshape(*orig_shape[:-1], d_out)

    sub = _sublane_multiple(x2d.dtype)
    if n <= sub:
        # Block equal to full array dims is always legal, even if < sublane.
        eff_tile = n
    else:
        # Cap the tile so the grid has >= 2 steps (keeps both v7x TCs busy),
        # rounded to the dtype's sublane granularity so partial tiles lower.
        cap = _round_up(pl.cdiv(n, 2), sub)
        eff_tile = max(sub, min(tile_n, cap))

    out2d = _forward_impl(x2d, w12, b12, tile_n=eff_tile)
    return out2d.reshape(*orig_shape[:-1], d_out)


def _reference(features, w_dense, b_dense, w_decoder, b_decoder):
    """Unfused two-matmul reference (dropout = identity at eval)."""
    d_in = features.shape[-1]
    x2d = features.reshape(-1, d_in).astype(jnp.float32)
    h = x2d @ w_dense.astype(jnp.float32).T + b_dense.astype(jnp.float32)
    o = h @ w_decoder.astype(jnp.float32).T + b_decoder.astype(jnp.float32)
    return o.reshape(*features.shape[:-1], w_decoder.shape[0])


if __name__ == "__main__":
    # Small shapes consistent with the module:
    # batch=2, seq=8, input_size=32, hidden_size=64, out_size=16
    batch, seq, input_size, hidden_size, out_size = 2, 8, 32, 64, 16

    key = jax.random.PRNGKey(0)
    k_x, k_w1, k_b1, k_w2, k_b2, k_x2 = jax.random.split(key, 6)

    features = jax.random.normal(k_x, (batch, seq, input_size), dtype=jnp.float32)

    # PyTorch Linear layout: weight [out, in], bias [out]
    w_dense = jax.random.normal(k_w1, (hidden_size, input_size), dtype=jnp.float32) * 0.05
    b_dense = jax.random.normal(k_b1, (hidden_size,), dtype=jnp.float32) * 0.05
    w_decoder = jax.random.normal(k_w2, (out_size, hidden_size), dtype=jnp.float32) * 0.05
    b_decoder = jax.random.normal(k_b2, (out_size,), dtype=jnp.float32) * 0.05

    # One-time parameter folding outside the hot path.
    params = prepare_transition_mlp_params(w_dense, b_dense, w_decoder, b_decoder)

    # --- Test 1: small demo shape, forced through the Pallas kernel ---------
    out_small = transition_mlp_forward(features, params, use_pallas=True)
    out_small = jax.block_until_ready(out_small)
    ref_small = _reference(features, w_dense, b_dense, w_decoder, b_decoder)
    assert out_small.shape == (batch, seq, out_size)
    assert jnp.allclose(out_small, ref_small, atol=1e-3, rtol=1e-3)

    # --- Test 2: larger N -> auto-dispatch picks the Pallas path, multi-step grid
    features_big = jax.random.normal(k_x2, (4, 576, input_size), dtype=jnp.float32)
    out_big = transition_mlp_forward(features_big, params)       # auto dispatch
    out_big = jax.block_until_ready(out_big)
    ref_big = _reference(features_big, w_dense, b_dense, w_decoder, b_decoder)
    assert out_big.shape == (4, 576, out_size)
    assert jnp.allclose(out_big, ref_big, atol=1e-3, rtol=1e-3)

    print("KERNEL_OK")
</pallas_src>

<mosaic_0001>
module attributes {stable_mosaic.version = 11 : i64} {
  func.func @transition_mlp_kernel(%arg0: i32, %arg1: memref<8x32xf32, #tpu.memory_space<vmem>>, %arg2: memref<32x16xf32, #tpu.memory_space<vmem>>, %arg3: memref<1x16xf32, #tpu.memory_space<vmem>>, %arg4: memref<8x16xf32, #tpu.memory_space<vmem>>) attributes {dimension_semantics = [#tpu.dimension_semantics<parallel>], iteration_bounds = array<i64: 2>, scalar_prefetch = 0 : i64, scratch_operands = 0 : i64, tpu.core_type = #tpu.core_type<tc>, window_params = [{transform_indices = @transform_0, window_bounds = array<i64: 8, 32>}, {pipeline_mode = #tpu.pipeline_mode<synchronous>, transform_indices = @transform_1, window_bounds = array<i64: 32, 16>}, {pipeline_mode = #tpu.pipeline_mode<synchronous>, transform_indices = @transform_2, window_bounds = array<i64: 1, 16>}, {transform_indices = @transform_3, window_bounds = array<i64: 8, 16>}]} {
    %c0 = arith.constant 0 : index
    %c0_0 = arith.constant 0 : index
    %0 = vector.load %arg1[%c0, %c0_0] : memref<8x32xf32, #tpu.memory_space<vmem>>, vector<8x32xf32>
    %c0_1 = arith.constant 0 : index
    %c0_2 = arith.constant 0 : index
    %1 = vector.load %arg2[%c0_1, %c0_2] : memref<32x16xf32, #tpu.memory_space<vmem>>, vector<32x16xf32>
    %cst = arith.constant dense<0.000000e+00> : vector<8x16xf32>
    %2 = tpu.matmul %0, %1, %cst {dimension_numbers = #tpu.dot_dimension_numbers<[1], [0], [0], [1], [0, 0, 1, 1], [], []>} : vector<8x32xf32>, vector<32x16xf32>, vector<8x16xf32> -> vector<8x16xf32>
    %c0_3 = arith.constant 0 : index
    %c0_4 = arith.constant 0 : index
    %3 = vector.load %arg3[%c0_3, %c0_4] : memref<1x16xf32, #tpu.memory_space<vmem>>, vector<1x16xf32>
    %4 = vector.broadcast %3 : vector<1x16xf32> to vector<8x16xf32>
    %5 = arith.addf %2, %4 : vector<8x16xf32>
    %c0_5 = arith.constant 0 : index
    %c0_6 = arith.constant 0 : index
    %6 = vector.load %arg4[%c0_5, %c0_6] : memref<8x16xf32, #tpu.memory_space<vmem>>, vector<8x16xf32>
    tpu.vector_store %arg4[%c0_5, %c0_6], %5 {strides = array<i32>} : memref<8x16xf32, #tpu.memory_space<vmem>>, vector<8x16xf32>,
    return
  }
  func.func @transform_0(%arg0: i32) -> (i32, i32) {
    %c0_i32 = arith.constant 0 : i32
    %c0_i32_0 = arith.constant 0 : i32
    return %arg0, %c0_i32 : i32, i32
  }
  func.func @transform_1(%arg0: i32) -> (i32, i32) {
    %c0_i32 = arith.constant 0 : i32
    %c0_i32_0 = arith.constant 0 : i32
    %c0_i32_1 = arith.constant 0 : i32
    return %c0_i32, %c0_i32_0 : i32, i32
  }
  func.func @transform_2(%arg0: i32) -> (i32, i32) {
    %c0_i32 = arith.constant 0 : i32
    %c0_i32_0 = arith.constant 0 : i32
    %c0_i32_1 = arith.constant 0 : i32
    return %c0_i32, %c0_i32_0 : i32, i32
  }
  func.func @transform_3(%arg0: i32) -> (i32, i32) {
    %c0_i32 = arith.constant 0 : i32
    %c0_i32_0 = arith.constant 0 : i32
    return %arg0, %c0_i32 : i32, i32
  }
}

</mosaic_0001>

<llo_original>
// kernel: _forward_impl.1
$region0: #{_forward_impl.1}
  #allocation0 [shape = 'u32[]', space=smem, size = 0x4, offset = 0x4, fixed_abs, tag = 'smem constant byte address 0x4 - core index']
  #allocation1 [shape = 'u32[72,128]{1,0:T(1,128)}', space=vmem, size = 0x9000, scoped, tag = 'internal scratch']
  %s0 = inlined_call_operand.vmem [shape: f32[16,32], index: 0, kind: input, shape index: {}]
  %s1 = inlined_call_operand.vmem [shape: f32[32,16], index: 1, kind: input, shape index: {}]
  %s2 = inlined_call_operand.vmem [shape: f32[1,16], index: 2, kind: input, shape index: {}]
  %s3 = inlined_call_operand.hbm [shape: f32[16,16], index: 3, kind: output, shape index: {}]
  %s4 = sld [smem:[#allocation0]]
  $region45: #{_forward_impl.1} parent=0
    _
  %s6 = ssub.s32 1, %s4
  %s7 = scalar_select 0, %s6, %s4
  $region1: #{_forward_impl.1} parent=0
    #allocation2 [shape = 'u8[8192]{0}', space=vmem, size = 0x2000, scoped, tag = 'output window, operand 0']
    #allocation3 [shape = 's32[2]{0}', space=sflag, size = 0x8, scoped, tag = 'scoped memory for _forward_impl.1']
    %8 = vsyncpa [#allocation3], 0
    %s9 = scalar_lea.sflag [#allocation3], 1
    %10 = vsyncpa %s9, 0
    loop: start=0, step=1, limit=4
    $region2: #{_forward_impl.1} parent=1 // loop_pre_header
      _
    $region3: #{_forward_impl.1} parent=1 // loop_header
      %s12 = sphi 0, %s16
      %p13 = scmp.ge.s32.totalorder %s12, 4
      %s22 = sphi 0, %s24
      %s25 = sphi 0, %s22
      %s26 = sphi 0, %s25
      %s42 = sphi 0, %s26
      %s46 = sphi 0, %s46
      %s48 = sphi 0, %s46
      %s49 = sphi 0, %s48
      %s63 = sphi 0, %s49
      %s67 = sphi 0, %s67
      %s69 = sphi 0, %s67
      %s70 = sphi 0, %s69
      %s84 = sphi 0, %s70
      %s90 = sphi 0, %s92
      %s93 = sphi 0, %s90
      %s94 = sphi 0, %s93
      %s110 = sphi 0, %s94
    $region4: #{_forward_impl.1} parent=1 // loop_header_branch
      %15 = sbr.rel (%p13) target = $region8
    $region5: #{_forward_impl.1} parent=1 // loop_body
      %s17 = ssub.s32 %s12, 1
      %s18 = ssub.s32 %s12, 2
      %s19 = sadd.s32 %s12, 1
      %s20 = ssub.s32 %s12, %s19
      %p21 = scmp.eq.s32.totalorder %s20, 0
      %s23 = sadd.s32 %s22, 1
      %s24 = scalar_select %p21, %s22, %s23
      %p27 = pneg %p21
      %p28 = scmp.eq.s32.totalorder %s12, 1
      %p29 = por %p27, %p28
      %p30 = scmp.ne.s32.totalorder %s22, %s25
      %p31 = scmp.eq.s32.totalorder %s12, 0
      %p32 = por %p30, %p31
      %p33 = scmp.ne.s32.totalorder %s22, %s25
      %p34 = scmp.eq.s32.totalorder %s17, 1
      %p35 = por %p33, %p34
      %p36 = scmp.ne.s32.totalorder %s25, %s26
      %p37 = scmp.eq.s32.totalorder %s17, 0
      %p38 = por %p36, %p37
      %p39 = scmp.ne.s32.totalorder %s25, %s26
      %p40 = scmp.eq.s32.totalorder %s18, 1
      %p41 = por %p39, %p40
      %p43 = scmp.ne.s32.totalorder %s26, %s42
      %p44 = scmp.eq.s32.totalorder %s18, 0
      %p45 = por %p43, %p44
      %s47 = sadd.s32 %s46, 1
      %p50 = scmp.eq.s32.totalorder %s12, 1
      %p51 = scmp.ne.s32.totalorder %s46, %s48
      %p52 = scmp.eq.s32.totalorder %s12, 0
      %p53 = por %p51, %p52
      %p54 = scmp.ne.s32.totalorder %s46, %s48
      %p55 = scmp.eq.s32.totalorder %s17, 1
      %p56 = por %p54, %p55
      %p57 = scmp.ne.s32.totalorder %s48, %s49
      %p58 = scmp.eq.s32.totalorder %s17, 0
      %p59 = por %p57, %p58
      %p60 = scmp.ne.s32.totalorder %s48, %s49
      %p61 = scmp.eq.s32.totalorder %s18, 1
      %p62 = por %p60, %p61
      %p64 = scmp.ne.s32.totalorder %s49, %s63
      %p65 = scmp.eq.s32.totalorder %s18, 0
      %p66 = por %p64, %p65
      %s68 = sadd.s32 %s67, 1
      %p71 = scmp.eq.s32.totalorder %s12, 1
      %p72 = scmp.ne.s32.totalorder %s67, %s69
      %p73 = scmp.eq.s32.totalorder %s12, 0
      %p74 = por %p72, %p73
      %p75 = scmp.ne.s32.totalorder %s67, %s69
      %p76 = scmp.eq.s32.totalorder %s17, 1
      %p77 = por %p75, %p76
      %p78 = scmp.ne.s32.totalorder %s69, %s70
      %p79 = scmp.eq.s32.totalorder %s17, 0
      %p80 = por %p78, %p79
      %p81 = scmp.ne.s32.totalorder %s69, %s70
      %p82 = scmp.eq.s32.totalorder %s18, 1
      %p83 = por %p81, %p82
      %p85 = scmp.ne.s32.totalorder %s70, %s84
      %p86 = scmp.eq.s32.totalorder %s18, 0
      %p87 = por %p85, %p86
      %s88 = ssub.s32 %s12, %s19
      %p89 = scmp.eq.s32.totalorder %s88, 0
      %s91 = sadd.s32 %s90, 1
      %s92 = scalar_select %p89, %s90, %s91
      %p95 = pneg %p89
      %p96 = scmp.eq.s32.totalorder %s12, 1
      %p97 = por %p95, %p96
      %p98 = scmp.ne.s32.totalorder %s90, %s93
      %p99 = scmp.eq.s32.totalorder %s12, 0
      %p100 = por %p98, %p99
      %p101 = scmp.ne.s32.totalorder %s90, %s93
      %p102 = scmp.eq.s32.totalorder %s17, 1
      %p103 = por %p101, %p102
      %p104 = scmp.ne.s32.totalorder %s93, %s94
      %p105 = scmp.eq.s32.totalorder %s17, 0
      %p106 = por %p104, %p105
      %p107 = scmp.ne.s32.totalorder %s93, %s94
      %p108 = scmp.eq.s32.totalorder %s18, 1
      %p109 = por %p107, %p108
      %p111 = scmp.ne.s32.totalorder %s94, %s110
      %p112 = scmp.eq.s32.totalorder %s18, 0
      %p113 = por %p111, %p112
      %p114 = scmp.le.s32.totalorder 1, %s12
      %p115 = scmp.lt.s32.totalorder %s12, 3
      %p116 = pnand %p114, %p115
      %p117 = pneg %p116
      // Predicated region
      $region9: #{_forward_impl.1} parent=5 // pred_check
        _
      $region10: #{_forward_impl.1} parent=5 // pred_check_branch
        %119 = sbr.rel (%p116) target = $region12
      $region11: #{_forward_impl.1} parent=5 // pred_region
        %s120 = ssub.s32 %s12, 1
        // Predicated region
        $region13: #{_forward_impl.1} parent=11 // pred_check
          %p121 = pneg %p59
        $region14: #{_forward_impl.1} parent=11 // pred_check_branch
          %123 = sbr.rel (%p121) target = $region16
        $region15: #{_forward_impl.1} parent=11 // pred_region
          _
        $region16: #{_forward_impl.1} parent=11 // pred_fallthru
          _
        // Predicated region
        $region17: #{_forward_impl.1} parent=11 // pred_check
          %p124 = pneg %p80
        $region18: #{_forward_impl.1} parent=11 // pred_check_branch
          %126 = sbr.rel (%p124) target = $region20
        $region19: #{_forward_impl.1} parent=11 // pred_region
          _
        $region20: #{_forward_impl.1} parent=11 // pred_fallthru
          _
      $region12: #{_forward_impl.1} parent=5 // pred_fallthru
        _
      %p127 = scmp.lt.s32.totalorder %s12, 2
      // Predicated region
      $region21: #{_forward_impl.1} parent=5 // pred_check
        %p128 = pneg %p127
      $region22: #{_forward_impl.1} parent=5 // pred_check_branch
        %130 = sbr.rel (%p128) target = $region24
      $region23: #{_forward_impl.1} parent=5 // pred_region
        // Predicated region
        $region25: #{_forward_impl.1} parent=23 // pred_check
          %p131 = pneg %p32
        $region26: #{_forward_impl.1} parent=23 // pred_check_branch
          %133 = sbr.rel (%p131) target = $region28
        $region27: #{_forward_impl.1} parent=23 // pred_region
          %p134 = scmp.lt.s32.totalorder %s12, 1
          %s135 = scalar_select %p134, %s12, 1
          %s136 = smul.addr %s135, 8
          %s137 = scalar_lea.vmem %s0, %s136
        $region28: #{_forward_impl.1} parent=23 // pred_fallthru
          _
      $region24: #{_forward_impl.1} parent=5 // pred_fallthru
        _
      %p138 = scmp.le.s32.totalorder 1, %s12
      %p139 = scmp.lt.s32.totalorder %s12, 3
      %p140 = pnand %p138, %p139
      %p141 = pneg %p140
      // Predicated region
      $region29: #{_forward_impl.1} parent=5 // pred_check
        _
      $region30: #{_forward_impl.1} parent=5 // pred_check_branch
        %143 = sbr.rel (%p140) target = $region32
      $region31: #{_forward_impl.1} parent=5 // pred_region
        %s144 = ssub.s32 %s12, 1
        %p145 = scmp.lt.s32.totalorder %s17, 1
        %s146 = scalar_select %p145, %s17, 1
        %s147 = smul.addr %s146, 8
        %s148 = scalar_lea.vmem %s0, %s147
        %p149 = pneg %p38
        %p150 = pneg %p35
        %p151 = pneg %p59
        %p152 = pneg %p56
        %p153 = pneg %p80
        %p154 = pneg %p77
        %p155 = pneg %p106
        %p156 = pneg %p103
        %s157 = sand.u32 %s93, 1
        %s158 = scalar_lea.sflag [#allocation3], %s157
        %s159 = sand.u32 %s93, 1
        %s160 = smul.addr %s159, 8
        %s161 = scalar_lea.vmem [#allocation2], %s160
        %p162 = scmp.lt.s32.totalorder %s17, 1
        %s163 = scalar_select %p162, %s17, 1
        %s164 = smul.addr %s163, 8
        %s165 = scalar_lea.vmem %s0, %s164
        %v166 = vld [vmem:[%s165] sm:$0xff]
        %v167 = vld [vmem:[%s1] sm:$0xff]
        %v168 = vld [vmem:[%s1 + $0x8] sm:$0xff]
        %v169 = vld [vmem:[%s1 + $0x10] sm:$0xff]
        %v170 = vld [vmem:[%s1 + $0x18] sm:$0xff]
        %v171 = vld [vmem:[%s2] sm:$0x1]
        %v173 = vperm.slane %v171, 0
        %vm175 = vcmask 261120
        %v177 = vsel %vm175, %v166, 0
        %179 = vmatpush.msra.mxu0 0.0
        %180 = vmatpush.msra.mxu0 0.0
        %181 = vmatpush.msra.mxu0 0.0
        %182 = vmatpush.msra.mxu0 0.0
        %183 = vmatpush.msra.mxu0 0.0
        %184 = vmatpush.msra.mxu0 0.0
        %185 = vmatpush.msra.mxu0 0.0
        %186 = vmatpush.msra.mxu0 0.0
        %187 = vmatpush.msra.mxu0 0.0
        %188 = vmatpush.msra.mxu0 0.0
        %189 = vmatpush.msra.mxu0 0.0
        %190 = vmatpush.msra.mxu0 0.0
        %191 = vmatpush.msra.mxu0 %v170
        %192 = vmatpush.msra.mxu0 %v169
        %193 = vmatpush.msra.mxu0 %v168
        %194 = vmatpush.msra.mxu0 %v167
        %195 = vmatmul.f32.gmra.mxu0 %v177
        %v196 = vpop.f32.mrf.mxu0
        %v197 = vadd.f32 %v173, %v196
        %198 = vdwg.mxu0
        %vm199 = vcmask 130048
        %200 = vst.msk [vmem:[%s161] sm:$0xff] %vm199, %v197
        %s201 = sand.u32 %s93, 1
        %s202 = scalar_lea.sflag [#allocation3], %s201
        %s203 = sand.u32 %s93, 1
        %s204 = smul.addr %s203, 8
        %s205 = scalar_lea.vmem [#allocation2], %s204
        // Predicated region
        $region33: #{_forward_impl.1} parent=31 // pred_check
          %p206 = pneg %p103
        $region34: #{_forward_impl.1} parent=31 // pred_check_branch
          %208 = sbr.rel (%p206) target = $region36
        $region35: #{_forward_impl.1} parent=31 // pred_region
          %210 = vsyncadd %s202, 0
          %s211 = smul.addr %s17, 8
          %s212 = scalar_lea.hbm %s3, %s211
          %s214 = sshll.u32 %s205, 4
          %s215 = int_to_ptr.vmem [resolvable:$true] %s214
          %s216 = sshll.u32 %s212, 4
          %s217 = int_to_ptr.hbm [resolvable:$true] %s216
          %219 = dma.vmem_to_hbm [thread:$0]  %s215, 128, %s217, %s202
        $region36: #{_forward_impl.1} parent=31 // pred_fallthru
          _
      $region32: #{_forward_impl.1} parent=5 // pred_fallthru
        _
      %p220 = scmp.le.s32.totalorder 2, %s12
      // Predicated region
      $region37: #{_forward_impl.1} parent=5 // pred_check
        %p221 = pneg %p220
      $region38: #{_forward_impl.1} parent=5 // pred_check_branch
        %223 = sbr.rel (%p221) target = $region40
      $region39: #{_forward_impl.1} parent=5 // pred_region
        %s224 = ssub.s32 %s12, 2
        // Predicated region
        $region41: #{_forward_impl.1} parent=39 // pred_check
          %p225 = pneg %p109
        $region42: #{_forward_impl.1} parent=39 // pred_check_branch
          %227 = sbr.rel (%p225) target = $region44
        $region43: #{_forward_impl.1} parent=39 // pred_region
          %s228 = sand.u32 %s94, 1
          %s229 = scalar_lea.sflag [#allocation3], %s228
          %s230 = sand.u32 %s94, 1
          %s231 = smul.addr %s230, 8
          %s232 = scalar_lea.vmem [#allocation2], %s231
          %234 = dma.done %s229, 128
        $region44: #{_forward_impl.1} parent=39 // pred_fallthru
          _
      $region40: #{_forward_impl.1} parent=5 // pred_fallthru
        _
    $region6: #{_forward_impl.1} parent=1 // loop_footer
      %s16 = sadd.s32 1, %s12
    $region7: #{_forward_impl.1} parent=1 // loop_footer_branch
      %11 = sbr.rel target = $region3
    $region8: #{_forward_impl.1} parent=1 // loop_exit
      _
    %235 = vsyncpa [#allocation3], 1
    %s236 = scalar_lea.sflag [#allocation3], 1
    %237 = vsyncpa %s236, 1

</llo_original>
